<compile_context>
chip_gen: v7x
topology: tpu7x:2x2x1
jax: 0.10.0
libtpu: 0.0.40
codegen_flags: <defaults>
</compile_context>

<pallas_src>
import functools

import jax
import jax.numpy as jnp
from jax.experimental import pallas as pl
from jax.experimental.pallas import tpu as pltpu


def _round_up(n, m):
    return ((n + m - 1) // m) * m


def _vmask_kernel(*refs, activation, flag, share_x):
    it = iter(refs)
    emb_ref = next(it)
    x_ref = emb_ref if share_x else next(it)
    g_ref = next(it) if flag == "train" else None
    w1_ref = next(it)
    b1_ref = next(it)
    w2_ref = next(it)
    b2_ref = next(it)
    p_ref = next(it)
    xp_ref = next(it)

    emb = emb_ref[...]                                     # [TM, E], stream dtype

    # h = act(embeds @ W1 + b1): MXU in the streaming dtype, f32 accumulate.
    h = jnp.dot(emb, w1_ref[...], preferred_element_type=jnp.float32)
    h = h + b1_ref[...]                                    # [TM, Hp] f32

    if activation == "tanh":
        h = jnp.tanh(h)
    elif activation == "sigmoid":
        h = jax.nn.sigmoid(h)
    elif activation == "relu":
        h = jnp.maximum(h, 0.0)
    elif activation == "leaky_relu":
        h = jnp.where(h > 0, h, 0.01 * h)
    else:
        raise ValueError(f"unknown activation {activation!r}")

    # p = h @ W2 + b2  (zero-padded rows of W2 => Hp padding is exact).
    p = jnp.dot(h, w2_ref[...], preferred_element_type=jnp.float32)
    p = p + b2_ref[...]                                    # [TM, 2] f32
    p_ref[...] = p

    d = p[:, 1:2] - p[:, 0:1]                              # [TM, 1] f32
    if flag == "train":
        # hard gumbel-softmax (tau=1): one_hot(argmax(p + g))[..., 1].
        # g_ref holds g1 - g0 (a logistic sample); ties -> class 0.
        r = (d + g_ref[...] > 0.0).astype(jnp.float32)
    else:
        # softmax(p, -1)[..., 1] == sigmoid(p1 - p0): single EUP transcendental.
        r = jax.nn.sigmoid(d)

    x_val = emb if share_x else x_ref[...]
    if xp_ref.dtype == jnp.float32 or x_val.dtype == jnp.float32:
        # f32 path: keep the multiply in f32 (exact vs. reference).
        xp_ref[...] = (r * x_val.astype(jnp.float32)).astype(xp_ref.dtype)
    else:
        # 16-bit streams: multiply in the streaming dtype, no f32 round-trip.
        xp_ref[...] = r.astype(x_val.dtype) * x_val


def vmask_forward(embeds, x, params, gumbel_noise=None, *, flag="eval",
                  activation="tanh", tm=None, stream_dtype=None):
    """VMASK forward. Returns (p [B,S,2] float32, x_prime [B,S,E]).

    If `x` is the same array object as `embeds` (or None), it is streamed from
    HBM only once. `stream_dtype` (e.g. jnp.bfloat16) optionally downcasts the
    embeds/x streams to halve HBM traffic; matmuls still accumulate in f32.
    """
    B, S, E = embeds.shape
    share_x = (x is None) or (x is embeds)
    if x is None:
        x = embeds
    assert x.shape == (B, S, E)
    if flag == "train" and gumbel_noise is None:
        raise ValueError("gumbel_noise is required when flag == 'train'")
    N = B * S

    sdt = jnp.dtype(stream_dtype) if stream_dtype is not None else jnp.dtype(x.dtype)

    w1 = jnp.asarray(params["w1"])
    b1 = jnp.asarray(params["b1"]).reshape(1, -1)
    w2 = jnp.asarray(params["w2"])
    b2 = jnp.asarray(params["b2"]).reshape(1, -1)
    H = w1.shape[1]

    # Pad the mask hidden dim to a lane-aligned multiple of 128. Zero-padding
    # W1/b1 columns and the matching (zero) rows of W2 keeps p exact.
    Hp = _round_up(H, 128)
    if Hp != H:
        w1 = jnp.pad(w1, ((0, 0), (0, Hp - H)))
        b1 = jnp.pad(b1, ((0, 0), (0, Hp - H)))
        w2 = jnp.pad(w2, ((0, Hp - H), (0, 0)))

    w1 = w1.astype(sdt)           # first matmul runs in the streaming dtype
    b1 = b1.astype(jnp.float32)
    w2 = w2.astype(jnp.float32)
    b2 = b2.astype(jnp.float32)

    emb2 = embeds.reshape(N, E).astype(sdt)     # free reshape; cast only if needed
    x2 = None if share_x else x.reshape(N, E).astype(sdt)

    item = jnp.dtype(sdt).itemsize
    sub = 8 if item >= 4 else (16 if item == 2 else 32)   # sublane quantum

    # --- Generation-aware VMEM budget & tile size ---------------------------
    vmem_cap = None
    try:
        info = pltpu.get_tpu_info()
        for name in ("vmem_capacity_bytes", "vmem_bytes", "vmem_size_bytes"):
            v = getattr(info, name, None)
            if v:
                vmem_cap = int(v)
                break
    except Exception:
        pass
    if not vmem_cap:
        vmem_cap = 64 << 20                      # conservative (v7x per-core)
    vmem_limit = max(min(vmem_cap - (12 << 20), 100 << 20), 32 << 20)
    budget = vmem_limit - (4 << 20)              # headroom for Mosaic scratch

    # Per-row footprint: double-buffered streams + single-instance f32 temps.
    per_row = (2 * E * item                          # embeds in
               + (0 if share_x else 2 * E * item)    # x in (if separate)
               + 2 * E * item                        # x' out
               + 2 * 2 * 4                           # p out
               + (2 * 4 if flag == "train" else 0)   # g1-g0 in
               + 4 * (Hp + E) + 64)                  # h + one f32 temp row
    weight_bytes = 2 * (E * Hp * item + Hp * 4 + Hp * 2 * 4 + 2 * 4)

    if tm is None:
        tm = 2048                                    # amortize ~0.35us/grid-step
    tm_eff = max(sub, min(int(tm), max(sub, (budget - weight_bytes) // per_row)))
    if N <= sub:
        tm_eff = N                                   # block == full dim (legal)
    else:
        # Keep >= 2 grid steps so ("parallel",) can shard over v7x's 2 cores.
        tm_eff = min(tm_eff, _round_up(pl.cdiv(N, 2), sub))
        tm_eff = max(sub, (tm_eff // sub) * sub)
    grid_n = pl.cdiv(N, tm_eff)                      # partial last block is OK

    # --- Specs ---------------------------------------------------------------
    row_E = pl.BlockSpec((tm_eff, E), lambda i: (i, 0))
    row_2 = pl.BlockSpec((tm_eff, 2), lambda i: (i, 0))
    row_1 = pl.BlockSpec((tm_eff, 1), lambda i: (i, 0))

    def resident(shape):                             # constant index_map => fetched once
        return pl.BlockSpec(shape, lambda i: (0, 0))

    in_specs = [row_E]
    operands = [emb2]
    if not share_x:
        in_specs.append(row_E)
        operands.append(x2)
    if flag == "train":
        g = jnp.asarray(gumbel_noise).reshape(N, 2).astype(jnp.float32)
        gd = g[:, 1:2] - g[:, 0:1]                   # logistic sample, [N, 1]
        in_specs.append(row_1)
        operands.append(gd)
    in_specs += [resident((E, Hp)), resident((1, Hp)),
                 resident((Hp, 2)), resident((1, 2))]
    operands += [w1, b1, w2, b2]

    out_specs = [row_2, row_E]
    out_shape = (jax.ShapeDtypeStruct((N, 2), jnp.float32),
                 jax.ShapeDtypeStruct((N, E), sdt))

    is_trans_act = activation in ("tanh", "sigmoid")
    cost = pl.CostEstimate(
        flops=2 * N * E * Hp + 2 * N * Hp * 2 + 2 * N * E,
        transcendentals=(N * Hp if is_trans_act else 0)
                        + (0 if flag == "train" else N),
        bytes_accessed=(N * E * item * (2 if share_x else 3)
                        + N * 2 * 4
                        + (N * 4 if flag == "train" else 0)
                        + E * Hp * item + Hp * 12 + 8),
    )

    kernel = functools.partial(_vmask_kernel, activation=activation,
                               flag=flag, share_x=share_x)

    p2, xp2 = pl.pallas_call(
        kernel,
        out_shape=out_shape,
        grid_spec=pltpu.PrefetchScalarGridSpec(
            num_scalar_prefetch=0,
            grid=(grid_n,),
            in_specs=in_specs,
            out_specs=out_specs,
        ),
        compiler_params=pltpu.CompilerParams(
            dimension_semantics=("parallel",),
            vmem_limit_bytes=int(vmem_limit)),
        cost_estimate=cost,
    )(*operands)

    return p2.reshape(B, S, 2), xp2.reshape(B, S, E)


if __name__ == "__main__":
    key = jax.random.PRNGKey(0)
    B, S, E, H = 2, 8, 32, 16     # batch, seq, embed_dim, mask_hidden_dim
    k1, k2, k3, k4, k5, k6 = jax.random.split(key, 6)

    # nn.Linear(embed_dim, mask_hidden_dim) stored as (in, out); Linear(H, 2).
    params = {
        "w1": jax.random.normal(k1, (E, H), jnp.float32) * 0.1,
        "b1": jax.random.normal(k2, (1, H), jnp.float32) * 0.1,
        "w2": jax.random.normal(k3, (H, 2), jnp.float32) * 0.1,
        "b2": jax.random.normal(k4, (1, 2), jnp.float32) * 0.1,
    }

    embeds = jax.random.normal(k5, (B, S, E), jnp.float32)
    g = jax.random.gumbel(k6, (B, S, 2), dtype=jnp.float32)

    # pure-JAX reference (mirrors the PyTorch module semantics)
    def reference(emb, xx, gg):
        h = jnp.tanh(emb @ params["w1"] + params["b1"])
        p = h @ params["w2"] + params["b2"]
        xp_eval = jax.nn.softmax(p, axis=2)[:, :, 1:2] * xx
        y = p + gg
        r_hard = (y[..., 1:2] > y[..., 0:1]).astype(jnp.float32)
        xp_tr = r_hard * xx
        return p, xp_eval, xp_tr

    # 1) shared embeds/x (standard VMASK usage): single streamed N*E input
    p_ref, xp_eval_ref, xp_tr_ref = reference(embeds, embeds, g)
    p_eval, xp_eval = vmask_forward(embeds, embeds, params, flag="eval")
    p_tr, xp_tr = vmask_forward(embeds, embeds, params, g, flag="train")
    jax.block_until_ready((p_eval, xp_eval, p_tr, xp_tr))
    assert jnp.allclose(p_eval, p_ref, atol=1e-5), "p mismatch"
    assert jnp.allclose(p_tr, p_ref, atol=1e-5), "p (train) mismatch"
    assert jnp.allclose(xp_eval, xp_eval_ref, atol=1e-5), "eval x' mismatch"
    assert jnp.allclose(xp_tr, xp_tr_ref, atol=1e-5), "train x' mismatch"

    # 2) distinct x tensor (exercises the two-stream kernel variant)
    x_sep = embeds + 0.25
    _, xp_eval_ref2, xp_tr_ref2 = reference(embeds, x_sep, g)
    _, xp_eval2 = vmask_forward(embeds, x_sep, params, flag="eval")
    _, xp_tr2 = vmask_forward(embeds, x_sep, params, g, flag="train")
    jax.block_until_ready((xp_eval2, xp_tr2))
    assert jnp.allclose(xp_eval2, xp_eval_ref2, atol=1e-5), "sep eval x' mismatch"
    assert jnp.allclose(xp_tr2, xp_tr_ref2, atol=1e-5), "sep train x' mismatch"

    # 3) ragged N (N=15) + small tile => multi-step grid with a partial block
    #    (no wrapper-side padding or slicing of the big tensors)
    B2, S2 = 3, 5
    emb_b = jax.random.normal(jax.random.PRNGKey(1), (B2, S2, E), jnp.float32)
    g_b = jax.random.gumbel(jax.random.PRNGKey(2), (B2, S2, 2), jnp.float32)
    p_b_ref, xp_b_eval_ref, xp_b_tr_ref = reference(emb_b, emb_b, g_b)
    p_b, xp_b = vmask_forward(emb_b, emb_b, params, flag="eval", tm=8)
    p_bt, xp_bt = vmask_forward(emb_b, emb_b, params, g_b, flag="train", tm=8)
    jax.block_until_ready((p_b, xp_b, p_bt, xp_bt))
    assert jnp.allclose(p_b, p_b_ref, atol=1e-5), "ragged p mismatch"
    assert jnp.allclose(xp_b, xp_b_eval_ref, atol=1e-5), "ragged eval x' mismatch"
    assert jnp.allclose(xp_bt, xp_b_tr_ref, atol=1e-5), "ragged train x' mismatch"

    # 4) bf16 streaming fast path (halves HBM traffic); loose-tolerance check
    p_bf, xp_bf = vmask_forward(embeds, embeds, params, flag="eval",
                                stream_dtype=jnp.bfloat16)
    jax.block_until_ready((p_bf, xp_bf))
    assert xp_bf.dtype == jnp.bfloat16, "bf16 output dtype not preserved"
    assert jnp.allclose(p_bf, p_ref, atol=5e-2), "bf16 p too far off"
    assert jnp.allclose(xp_bf.astype(jnp.float32), xp_eval_ref, atol=5e-2), \
        "bf16 x' too far off"

    print("KERNEL_OK")
</pallas_src>

<mosaic_0001>
module attributes {stable_mosaic.version = 11 : i64} {
  func.func @_vmask_kernel(%arg0: i32, %arg1: memref<8x32xf32, #tpu.memory_space<vmem>>, %arg2: memref<32x128xf32, #tpu.memory_space<vmem>>, %arg3: memref<1x128xf32, #tpu.memory_space<vmem>>, %arg4: memref<128x2xf32, #tpu.memory_space<vmem>>, %arg5: memref<1x2xf32, #tpu.memory_space<vmem>>, %arg6: memref<8x2xf32, #tpu.memory_space<vmem>>, %arg7: memref<8x32xf32, #tpu.memory_space<vmem>>) attributes {dimension_semantics = [#tpu.dimension_semantics<parallel>], iteration_bounds = array<i64: 2>, scalar_prefetch = 0 : i64, scratch_operands = 0 : i64, tpu.core_type = #tpu.core_type<tc>, window_params = [{transform_indices = @transform_0, window_bounds = array<i64: 8, 32>}, {pipeline_mode = #tpu.pipeline_mode<synchronous>, transform_indices = @transform_1, window_bounds = array<i64: 32, 128>}, {pipeline_mode = #tpu.pipeline_mode<synchronous>, transform_indices = @transform_2, window_bounds = array<i64: 1, 128>}, {pipeline_mode = #tpu.pipeline_mode<synchronous>, transform_indices = @transform_3, window_bounds = array<i64: 128, 2>}, {pipeline_mode = #tpu.pipeline_mode<synchronous>, transform_indices = @transform_4, window_bounds = array<i64: 1, 2>}, {transform_indices = @transform_5, window_bounds = array<i64: 8, 2>}, {transform_indices = @transform_6, window_bounds = array<i64: 8, 32>}]} {
    %c0 = arith.constant 0 : index
    %c0_0 = arith.constant 0 : index
    %0 = vector.load %arg1[%c0, %c0_0] : memref<8x32xf32, #tpu.memory_space<vmem>>, vector<8x32xf32>
    %c0_1 = arith.constant 0 : index
    %c0_2 = arith.constant 0 : index
    %1 = vector.load %arg2[%c0_1, %c0_2] : memref<32x128xf32, #tpu.memory_space<vmem>>, vector<32x128xf32>
    %cst = arith.constant dense<0.000000e+00> : vector<8x128xf32>
    %2 = tpu.matmul %0, %1, %cst {dimension_numbers = #tpu.dot_dimension_numbers<[1], [0], [0], [1], [0, 0, 1, 1], [], []>} : vector<8x32xf32>, vector<32x128xf32>, vector<8x128xf32> -> vector<8x128xf32>
    %c0_3 = arith.constant 0 : index
    %c0_4 = arith.constant 0 : index
    %3 = vector.load %arg3[%c0_3, %c0_4] : memref<1x128xf32, #tpu.memory_space<vmem>>, vector<1x128xf32>
    %4 = vector.broadcast %3 : vector<1x128xf32> to vector<8x128xf32>
    %5 = arith.addf %2, %4 : vector<8x128xf32>
    %6 = math.tanh %5 : vector<8x128xf32>
    %c0_5 = arith.constant 0 : index
    %c0_6 = arith.constant 0 : index
    %7 = vector.load %arg4[%c0_5, %c0_6] : memref<128x2xf32, #tpu.memory_space<vmem>>, vector<128x2xf32>
    %cst_7 = arith.constant dense<0.000000e+00> : vector<8x2xf32>
    %8 = tpu.matmul %6, %7, %cst_7 {dimension_numbers = #tpu.dot_dimension_numbers<[1], [0], [0], [1], [0, 0, 1, 1], [], []>} : vector<8x128xf32>, vector<128x2xf32>, vector<8x2xf32> -> vector<8x2xf32>
    %c0_8 = arith.constant 0 : index
    %c0_9 = arith.constant 0 : index
    %9 = vector.load %arg5[%c0_8, %c0_9] : memref<1x2xf32, #tpu.memory_space<vmem>>, vector<1x2xf32>
    %10 = vector.broadcast %9 : vector<1x2xf32> to vector<8x2xf32>
    %11 = arith.addf %8, %10 : vector<8x2xf32>
    %c0_10 = arith.constant 0 : index
    %c0_11 = arith.constant 0 : index
    %12 = vector.load %arg6[%c0_10, %c0_11] : memref<8x2xf32, #tpu.memory_space<vmem>>, vector<8x2xf32>
    tpu.vector_store %arg6[%c0_10, %c0_11], %11 {strides = array<i32>} : memref<8x2xf32, #tpu.memory_space<vmem>>, vector<8x2xf32>,
    %13 = vector.extract_strided_slice %11 {offsets = [0, 1], sizes = [8, 1], strides = [1, 1]} : vector<8x2xf32> to vector<8x1xf32>
    %14 = vector.extract_strided_slice %11 {offsets = [0, 0], sizes = [8, 1], strides = [1, 1]} : vector<8x2xf32> to vector<8x1xf32>
    %15 = arith.subf %13, %14 : vector<8x1xf32>
    %16 = arith.negf %15 : vector<8x1xf32>
    %17 = math.exp %16 : vector<8x1xf32>
    %cst_12 = arith.constant 1.000000e+00 : f32
    %18 = vector.broadcast %cst_12 : f32 to vector<8x1xf32>
    %19 = arith.addf %18, %17 : vector<8x1xf32>
    %20 = arith.divf %18, %19 : vector<8x1xf32>
    %21 = vector.broadcast %20 : vector<8x1xf32> to vector<8x32xf32>
    %22 = arith.mulf %21, %0 : vector<8x32xf32>
    %c0_13 = arith.constant 0 : index
    %c0_14 = arith.constant 0 : index
    %23 = vector.load %arg7[%c0_13, %c0_14] : memref<8x32xf32, #tpu.memory_space<vmem>>, vector<8x32xf32>
    tpu.vector_store %arg7[%c0_13, %c0_14], %22 {strides = array<i32>} : memref<8x32xf32, #tpu.memory_space<vmem>>, vector<8x32xf32>,
    return
  }
  func.func @transform_0(%arg0: i32) -> (i32, i32) {
    %c0_i32 = arith.constant 0 : i32
    %c0_i32_0 = arith.constant 0 : i32
    return %arg0, %c0_i32 : i32, i32
  }
  func.func @transform_1(%arg0: i32) -> (i32, i32) {
    %c0_i32 = arith.constant 0 : i32
    %c0_i32_0 = arith.constant 0 : i32
    %c0_i32_1 = arith.constant 0 : i32
    return %c0_i32, %c0_i32_0 : i32, i32
  }
  func.func @transform_2(%arg0: i32) -> (i32, i32) {
    %c0_i32 = arith.constant 0 : i32
    %c0_i32_0 = arith.constant 0 : i32
    %c0_i32_1 = arith.constant 0 : i32
    return %c0_i32, %c0_i32_0 : i32, i32
  }
  func.func @transform_3(%arg0: i32) -> (i32, i32) {
    %c0_i32 = arith.constant 0 : i32
    %c0_i32_0 = arith.constant 0 : i32
    %c0_i32_1 = arith.constant 0 : i32
    return %c0_i32, %c0_i32_0 : i32, i32
  }
  func.func @transform_4(%arg0: i32) -> (i32, i32) {
    %c0_i32 = arith.constant 0 : i32
    %c0_i32_0 = arith.constant 0 : i32
    %c0_i32_1 = arith.constant 0 : i32
    return %c0_i32, %c0_i32_0 : i32, i32
  }
  func.func @transform_5(%arg0: i32) -> (i32, i32) {
    %c0_i32 = arith.constant 0 : i32
    %c0_i32_0 = arith.constant 0 : i32
    return %arg0, %c0_i32 : i32, i32
  }
  func.func @transform_6(%arg0: i32) -> (i32, i32) {
    %c0_i32 = arith.constant 0 : i32
    %c0_i32_0 = arith.constant 0 : i32
    return %arg0, %c0_i32 : i32, i32
  }
}

</mosaic_0001>

<llo_original>
// kernel: tpu_custom_call.1
$region0: #{tpu_custom_call.1}
  #allocation0 [shape = 'u32[]', space=smem, size = 0x4, offset = 0x4, fixed_abs, tag = 'smem constant byte address 0x4 - core index']
  #allocation1 [shape = 'u32[144,128]{1,0:T(1,128)}', space=vmem, size = 0x12000, scoped, tag = 'internal scratch']
  %s0 = inlined_call_operand.vmem [shape: f32[16,32], index: 0, kind: input, shape index: {}]
  %s1 = inlined_call_operand.vmem [shape: f32[32,128], index: 1, kind: input, shape index: {}]
  %s2 = inlined_call_operand.vmem [shape: f32[1,128], index: 2, kind: input, shape index: {}]
  %s3 = inlined_call_operand.vmem [shape: f32[128,2], index: 3, kind: input, shape index: {}]
  %s4 = inlined_call_operand.vmem [shape: f32[1,2], index: 4, kind: input, shape index: {}]
  %s5 = inlined_call_operand.vmem [shape: f32[16,2], index: 5, kind: output, shape index: {0}]
  %s6 = inlined_call_operand.hbm [shape: f32[16,32], index: 6, kind: output, shape index: {1}]
  %7 = xla_tuple %s5, %s6
  %s8 = sld [smem:[#allocation0]]
  $region61: #{tpu_custom_call.1} parent=0
    _
  %s10 = ssub.s32 1, %s8
  %s11 = scalar_select 0, %s10, %s8
  $region1: #{tpu_custom_call.1} parent=0
    #allocation2 [shape = 'u8[8192]{0}', space=vmem, size = 0x2000, scoped, tag = 'output window, operand 1']
    #allocation3 [shape = 's32[2]{0}', space=sflag, size = 0x8, scoped, tag = 'scoped memory for tpu_custom_call.1']
    %12 = vsyncpa [#allocation3], 0
    %s13 = scalar_lea.sflag [#allocation3], 1
    %14 = vsyncpa %s13, 0
    loop: start=0, step=1, limit=4
    $region2: #{tpu_custom_call.1} parent=1 // loop_pre_header
      _
    $region3: #{tpu_custom_call.1} parent=1 // loop_header
      %s16 = sphi 0, %s20
      %p17 = scmp.ge.s32.totalorder %s16, 4
      %s26 = sphi 0, %s28
      %s29 = sphi 0, %s26
      %s30 = sphi 0, %s29
      %s46 = sphi 0, %s30
      %s50 = sphi 0, %s50
      %s52 = sphi 0, %s50
      %s53 = sphi 0, %s52
      %s67 = sphi 0, %s53
      %s71 = sphi 0, %s71
      %s73 = sphi 0, %s71
      %s74 = sphi 0, %s73
      %s88 = sphi 0, %s74
      %s92 = sphi 0, %s92
      %s94 = sphi 0, %s92
      %s95 = sphi 0, %s94
      %s109 = sphi 0, %s95
      %s113 = sphi 0, %s113
      %s115 = sphi 0, %s113
      %s116 = sphi 0, %s115
      %s130 = sphi 0, %s116
      %s136 = sphi 0, %s138
      %s139 = sphi 0, %s136
      %s140 = sphi 0, %s139
      %s156 = sphi 0, %s140
      %s162 = sphi 0, %s164
      %s165 = sphi 0, %s162
      %s166 = sphi 0, %s165
      %s182 = sphi 0, %s166
    $region4: #{tpu_custom_call.1} parent=1 // loop_header_branch
      %19 = sbr.rel (%p17) target = $region8
    $region5: #{tpu_custom_call.1} parent=1 // loop_body
      %s21 = ssub.s32 %s16, 1
      %s22 = ssub.s32 %s16, 2
      %s23 = sadd.s32 %s16, 1
      %s24 = ssub.s32 %s16, %s23
      %p25 = scmp.eq.s32.totalorder %s24, 0
      %s27 = sadd.s32 %s26, 1
      %s28 = scalar_select %p25, %s26, %s27
      %p31 = pneg %p25
      %p32 = scmp.eq.s32.totalorder %s16, 1
      %p33 = por %p31, %p32
      %p34 = scmp.ne.s32.totalorder %s26, %s29
      %p35 = scmp.eq.s32.totalorder %s16, 0
      %p36 = por %p34, %p35
      %p37 = scmp.ne.s32.totalorder %s26, %s29
      %p38 = scmp.eq.s32.totalorder %s21, 1
      %p39 = por %p37, %p38
      %p40 = scmp.ne.s32.totalorder %s29, %s30
      %p41 = scmp.eq.s32.totalorder %s21, 0
      %p42 = por %p40, %p41
      %p43 = scmp.ne.s32.totalorder %s29, %s30
      %p44 = scmp.eq.s32.totalorder %s22, 1
      %p45 = por %p43, %p44
      %p47 = scmp.ne.s32.totalorder %s30, %s46
      %p48 = scmp.eq.s32.totalorder %s22, 0
      %p49 = por %p47, %p48
      %s51 = sadd.s32 %s50, 1
      %p54 = scmp.eq.s32.totalorder %s16, 1
      %p55 = scmp.ne.s32.totalorder %s50, %s52
      %p56 = scmp.eq.s32.totalorder %s16, 0
      %p57 = por %p55, %p56
      %p58 = scmp.ne.s32.totalorder %s50, %s52
      %p59 = scmp.eq.s32.totalorder %s21, 1
      %p60 = por %p58, %p59
      %p61 = scmp.ne.s32.totalorder %s52, %s53
      %p62 = scmp.eq.s32.totalorder %s21, 0
      %p63 = por %p61, %p62
      %p64 = scmp.ne.s32.totalorder %s52, %s53
      %p65 = scmp.eq.s32.totalorder %s22, 1
      %p66 = por %p64, %p65
      %p68 = scmp.ne.s32.totalorder %s53, %s67
      %p69 = scmp.eq.s32.totalorder %s22, 0
      %p70 = por %p68, %p69
      %s72 = sadd.s32 %s71, 1
      %p75 = scmp.eq.s32.totalorder %s16, 1
      %p76 = scmp.ne.s32.totalorder %s71, %s73
      %p77 = scmp.eq.s32.totalorder %s16, 0
      %p78 = por %p76, %p77
      %p79 = scmp.ne.s32.totalorder %s71, %s73
      %p80 = scmp.eq.s32.totalorder %s21, 1
      %p81 = por %p79, %p80
      %p82 = scmp.ne.s32.totalorder %s73, %s74
      %p83 = scmp.eq.s32.totalorder %s21, 0
      %p84 = por %p82, %p83
      %p85 = scmp.ne.s32.totalorder %s73, %s74
      %p86 = scmp.eq.s32.totalorder %s22, 1
      %p87 = por %p85, %p86
      %p89 = scmp.ne.s32.totalorder %s74, %s88
      %p90 = scmp.eq.s32.totalorder %s22, 0
      %p91 = por %p89, %p90
      %s93 = sadd.s32 %s92, 1
      %p96 = scmp.eq.s32.totalorder %s16, 1
      %p97 = scmp.ne.s32.totalorder %s92, %s94
      %p98 = scmp.eq.s32.totalorder %s16, 0
      %p99 = por %p97, %p98
      %p100 = scmp.ne.s32.totalorder %s92, %s94
      %p101 = scmp.eq.s32.totalorder %s21, 1
      %p102 = por %p100, %p101
      %p103 = scmp.ne.s32.totalorder %s94, %s95
      %p104 = scmp.eq.s32.totalorder %s21, 0
      %p105 = por %p103, %p104
      %p106 = scmp.ne.s32.totalorder %s94, %s95
      %p107 = scmp.eq.s32.totalorder %s22, 1
      %p108 = por %p106, %p107
      %p110 = scmp.ne.s32.totalorder %s95, %s109
      %p111 = scmp.eq.s32.totalorder %s22, 0
      %p112 = por %p110, %p111
      %s114 = sadd.s32 %s113, 1
      %p117 = scmp.eq.s32.totalorder %s16, 1
      %p118 = scmp.ne.s32.totalorder %s113, %s115
      %p119 = scmp.eq.s32.totalorder %s16, 0
      %p120 = por %p118, %p119
      %p121 = scmp.ne.s32.totalorder %s113, %s115
      %p122 = scmp.eq.s32.totalorder %s21, 1
      %p123 = por %p121, %p122
      %p124 = scmp.ne.s32.totalorder %s115, %s116
      %p125 = scmp.eq.s32.totalorder %s21, 0
      %p126 = por %p124, %p125
      %p127 = scmp.ne.s32.totalorder %s115, %s116
      %p128 = scmp.eq.s32.totalorder %s22, 1
      %p129 = por %p127, %p128
      %p131 = scmp.ne.s32.totalorder %s116, %s130
      %p132 = scmp.eq.s32.totalorder %s22, 0
      %p133 = por %p131, %p132
      %s134 = ssub.s32 %s16, %s23
      %p135 = scmp.eq.s32.totalorder %s134, 0
      %s137 = sadd.s32 %s136, 1
      %s138 = scalar_select %p135, %s136, %s137
      %p141 = pneg %p135
      %p142 = scmp.eq.s32.totalorder %s16, 1
      %p143 = por %p141, %p142
      %p144 = scmp.ne.s32.totalorder %s136, %s139
      %p145 = scmp.eq.s32.totalorder %s16, 0
      %p146 = por %p144, %p145
      %p147 = scmp.ne.s32.totalorder %s136, %s139
      %p148 = scmp.eq.s32.totalorder %s21, 1
      %p149 = por %p147, %p148
      %p150 = scmp.ne.s32.totalorder %s139, %s140
      %p151 = scmp.eq.s32.totalorder %s21, 0
      %p152 = por %p150, %p151
      %p153 = scmp.ne.s32.totalorder %s139, %s140
      %p154 = scmp.eq.s32.totalorder %s22, 1
      %p155 = por %p153, %p154
      %p157 = scmp.ne.s32.totalorder %s140, %s156
      %p158 = scmp.eq.s32.totalorder %s22, 0
      %p159 = por %p157, %p158
      %s160 = ssub.s32 %s16, %s23
      %p161 = scmp.eq.s32.totalorder %s160, 0
      %s163 = sadd.s32 %s162, 1
      %s164 = scalar_select %p161, %s162, %s163
      %p167 = pneg %p161
      %p168 = scmp.eq.s32.totalorder %s16, 1
      %p169 = por %p167, %p168
      %p170 = scmp.ne.s32.totalorder %s162, %s165
      %p171 = scmp.eq.s32.totalorder %s16, 0
      %p172 = por %p170, %p171
      %p173 = scmp.ne.s32.totalorder %s162, %s165
      %p174 = scmp.eq.s32.totalorder %s21, 1
      %p175 = por %p173, %p174
      %p176 = scmp.ne.s32.totalorder %s165, %s166
      %p177 = scmp.eq.s32.totalorder %s21, 0
      %p178 = por %p176, %p177
      %p179 = scmp.ne.s32.totalorder %s165, %s166
      %p180 = scmp.eq.s32.totalorder %s22, 1
      %p181 = por %p179, %p180
      %p183 = scmp.ne.s32.totalorder %s166, %s182
      %p184 = scmp.eq.s32.totalorder %s22, 0
      %p185 = por %p183, %p184
      %p186 = scmp.le.s32.totalorder 1, %s16
      %p187 = scmp.lt.s32.totalorder %s16, 3
      %p188 = pnand %p186, %p187
      %p189 = pneg %p188
      // Predicated region
      $region9: #{tpu_custom_call.1} parent=5 // pred_check
        _
      $region10: #{tpu_custom_call.1} parent=5 // pred_check_branch
        %191 = sbr.rel (%p188) target = $region12
      $region11: #{tpu_custom_call.1} parent=5 // pred_region
        %s192 = ssub.s32 %s16, 1
        // Predicated region
        $region13: #{tpu_custom_call.1} parent=11 // pred_check
          %p193 = pneg %p63
        $region14: #{tpu_custom_call.1} parent=11 // pred_check_branch
          %195 = sbr.rel (%p193) target = $region16
        $region15: #{tpu_custom_call.1} parent=11 // pred_region
          _
        $region16: #{tpu_custom_call.1} parent=11 // pred_fallthru
          _
        // Predicated region
        $region17: #{tpu_custom_call.1} parent=11 // pred_check
          %p196 = pneg %p84
        $region18: #{tpu_custom_call.1} parent=11 // pred_check_branch
          %198 = sbr.rel (%p196) target = $region20
        $region19: #{tpu_custom_call.1} parent=11 // pred_region
          _
        $region20: #{tpu_custom_call.1} parent=11 // pred_fallthru
          _
        // Predicated region
        $region21: #{tpu_custom_call.1} parent=11 // pred_check
          %p199 = pneg %p105
        $region22: #{tpu_custom_call.1} parent=11 // pred_check_branch
          %201 = sbr.rel (%p199) target = $region24
        $region23: #{tpu_custom_call.1} parent=11 // pred_region
          _
        $region24: #{tpu_custom_call.1} parent=11 // pred_fallthru
          _
        // Predicated region
        $region25: #{tpu_custom_call.1} parent=11 // pred_check
          %p202 = pneg %p126
        $region26: #{tpu_custom_call.1} parent=11 // pred_check_branch
          %204 = sbr.rel (%p202) target = $region28
        $region27: #{tpu_custom_call.1} parent=11 // pred_region
          _
        $region28: #{tpu_custom_call.1} parent=11 // pred_fallthru
          _
      $region12: #{tpu_custom_call.1} parent=5 // pred_fallthru
        _
      %p205 = scmp.lt.s32.totalorder %s16, 2
      // Predicated region
      $region29: #{tpu_custom_call.1} parent=5 // pred_check
        %p206 = pneg %p205
      $region30: #{tpu_custom_call.1} parent=5 // pred_check_branch
        %208 = sbr.rel (%p206) target = $region32
      $region31: #{tpu_custom_call.1} parent=5 // pred_region
        // Predicated region
        $region33: #{tpu_custom_call.1} parent=31 // pred_check
          %p209 = pneg %p36
        $region34: #{tpu_custom_call.1} parent=31 // pred_check_branch
          %211 = sbr.rel (%p209) target = $region36
        $region35: #{tpu_custom_call.1} parent=31 // pred_region
          %p212 = scmp.lt.s32.totalorder %s16, 1
          %s213 = scalar_select %p212, %s16, 1
          %s214 = smul.addr %s213, 8
          %s215 = scalar_lea.vmem %s0, %s214
        $region36: #{tpu_custom_call.1} parent=31 // pred_fallthru
          _
      $region32: #{tpu_custom_call.1} parent=5 // pred_fallthru
        _
      %p216 = scmp.le.s32.totalorder 1, %s16
      %p217 = scmp.lt.s32.totalorder %s16, 3
      %p218 = pnand %p216, %p217
      %p219 = pneg %p218
      // Predicated region
      $region37: #{tpu_custom_call.1} parent=5 // pred_check
        _
      $region38: #{tpu_custom_call.1} parent=5 // pred_check_branch
        %221 = sbr.rel (%p218) target = $region40
      $region39: #{tpu_custom_call.1} parent=5 // pred_region
        %s222 = ssub.s32 %s16, 1
        %p223 = scmp.lt.s32.totalorder %s21, 1
        %s224 = scalar_select %p223, %s21, 1
        %s225 = smul.addr %s224, 8
        %s226 = scalar_lea.vmem %s0, %s225
        %p227 = pneg %p42
        %p228 = pneg %p39
        %p229 = pneg %p63
        %p230 = pneg %p60
        %p231 = pneg %p84
        %p232 = pneg %p81
        %p233 = pneg %p105
        %p234 = pneg %p102
        %p235 = pneg %p126
        %p236 = pneg %p123
        %p237 = pneg %p152
        %p238 = pneg %p149
        %p239 = scmp.lt.s32.totalorder %s21, 1
        %s240 = scalar_select %p239, %s21, 1
        %s241 = smul.addr %s240, 8
        %s242 = scalar_lea.vmem %s5, %s241
        %p243 = pneg %p178
        %p244 = pneg %p175
        %s245 = sand.u32 %s165, 1
        %s246 = scalar_lea.sflag [#allocation3], %s245
        %s247 = sand.u32 %s165, 1
        %s248 = smul.addr %s247, 8
        %s249 = scalar_lea.vmem [#allocation2], %s248
        %p250 = scmp.lt.s32.totalorder %s21, 1
        %s251 = scalar_select %p250, %s21, 1
        %s252 = smul.addr %s251, 8
        %s253 = scalar_lea.vmem %s0, %s252
        %p254 = scmp.lt.s32.totalorder %s21, 1
        %s255 = scalar_select %p254, %s21, 1
        %s256 = smul.addr %s255, 8
        %s257 = scalar_lea.vmem %s5, %s256
        %v258 = vld [vmem:[%s253] sm:$0xff]
        %v259 = vld [vmem:[%s1] sm:$0xff]
        %v260 = vld [vmem:[%s1 + $0x8] sm:$0xff]
        %v261 = vld [vmem:[%s1 + $0x10] sm:$0xff]
        %v262 = vld [vmem:[%s1 + $0x18] sm:$0xff]
        %v263 = vld [vmem:[%s2] sm:$0x1]
        %v265 = vlaneseq
        %v266 = vshrl.u32 %v265, 7
        %v267 = vsub.s32 0, %v266
        %v268 = vrot.slane %v263, %v267
        %vm270 = vcmask 261120
        %v272 = vsel %vm270, %v258, 0
        %274 = vmatprep.subr.mxu0 0.0
        %275 = vmatpush1.msra.mxu0 %v259
        %276 = vmatprep.subr.mxu0 0.0
        %277 = vmatpush1.msra.mxu0 %v260
        %278 = vmatprep.subr.mxu0 0.0
        %279 = vmatpush1.msra.mxu0 %v261
        %280 = vmatprep.subr.mxu0 0.0
        %281 = vmatpush1.msra.mxu0 %v262
        %282 = vmatprep.subr.mxu0 0.0
        %283 = vmatpush1.msra.mxu0 0.0
        %284 = vmatprep.subr.mxu0 0.0
        %285 = vmatpush1.msra.mxu0 0.0
        %286 = vmatprep.subr.mxu0 0.0
        %287 = vmatpush1.msra.mxu0 0.0
        %288 = vmatprep.subr.mxu0 0.0
        %289 = vmatpush1.msra.mxu0 0.0
        %290 = vmatprep.subr.mxu0 0.0
        %291 = vmatpush1.msra.mxu0 0.0
        %292 = vmatprep.subr.mxu0 0.0
        %293 = vmatpush1.msra.mxu0 0.0
        %294 = vmatprep.subr.mxu0 0.0
        %295 = vmatpush1.msra.mxu0 0.0
        %296 = vmatprep.subr.mxu0 0.0
        %297 = vmatpush1.msra.mxu0 0.0
        %298 = vmatprep.subr.mxu0 0.0
        %299 = vmatpush1.msra.mxu0 0.0
        %300 = vmatprep.subr.mxu0 0.0
        %301 = vmatpush1.msra.mxu0 0.0
        %302 = vmatprep.subr.mxu0 0.0
        %303 = vmatpush1.msra.mxu0 0.0
        %304 = vmatprep.subr.mxu0 0.0
        %305 = vmatpush1.msra.mxu0 0.0
        %306 = vmatprep.subr.mxu0 0.0
        %307 = vmatpush1.msra.mxu0 0.0
        %308 = vmatprep.subr.mxu0 0.0
        %309 = vmatpush1.msra.mxu0 0.0
        %310 = vmatprep.subr.mxu0 0.0
        %311 = vmatpush1.msra.mxu0 0.0
        %312 = vmatprep.subr.mxu0 0.0
        %313 = vmatpush1.msra.mxu0 0.0
        %314 = vmatprep.subr.mxu0 0.0
        %315 = vmatpush1.msra.mxu0 0.0
        %316 = vmatprep.subr.mxu0 0.0
        %317 = vmatpush1.msra.mxu0 0.0
        %318 = vmatprep.subr.mxu0 0.0
        %319 = vmatpush1.msra.mxu0 0.0
        %320 = vmatprep.subr.mxu0 0.0
        %321 = vmatpush1.msra.mxu0 0.0
        %322 = vmatprep.subr.mxu0 0.0
        %323 = vmatpush1.msra.mxu0 0.0
        %324 = vmatprep.subr.mxu0 0.0
        %325 = vmatpush1.msra.mxu0 0.0
        %326 = vmatprep.subr.mxu0 0.0
        %327 = vmatpush1.msra.mxu0 0.0
        %328 = vmatprep.subr.mxu0 0.0
        %329 = vmatpush1.msra.mxu0 0.0
        %330 = vmatprep.subr.mxu0 0.0
        %331 = vmatpush1.msra.mxu0 0.0
        %332 = vmatprep.subr.mxu0 0.0
        %333 = vmatpush1.msra.mxu0 0.0
        %334 = vmatprep.subr.mxu0 0.0
        %335 = vmatpush1.msra.mxu0 0.0
        %336 = vmatprep.subr.mxu0 0.0
        %337 = vmatpush1.msra.mxu0 0.0
        %338 = vmatprep.mubr.f32.mxu0 0.0
        %339 = vmatmul.mubr.f32.gmra.mrb[0].mxu0 %v272
        %v340 = vpop.f32.mrb[0].mxu0
        %v341 = vadd.f32 %v268, %v340
        %v342 = vpop.f32.mrb[0].mxu0
        %343 = vdwg.mxu0
        %v344 = vtanh.pop %v341
        %v345 = vld [vmem:[%s3] sm:$0xff]
        %v346 = vld [vmem:[%s3 + $0x8] sm:$0xff]
        %v347 = vld [vmem:[%s3 + $0x10] sm:$0xff]
        %v348 = vld [vmem:[%s3 + $0x18] sm:$0xff]
        %v349 = vld [vmem:[%s3 + $0x20] sm:$0xff]
        %v350 = vld [vmem:[%s3 + $0x28] sm:$0xff]
        %v351 = vld [vmem:[%s3 + $0x30] sm:$0xff]
        %v352 = vld [vmem:[%s3 + $0x38] sm:$0xff]
        %v353 = vld [vmem:[%s3 + $0x40] sm:$0xff]
        %v354 = vld [vmem:[%s3 + $0x48] sm:$0xff]
        %v355 = vld [vmem:[%s3 + $0x50] sm:$0xff]
        %v356 = vld [vmem:[%s3 + $0x58] sm:$0xff]
        %v357 = vld [vmem:[%s3 + $0x60] sm:$0xff]
        %v358 = vld [vmem:[%s3 + $0x68] sm:$0xff]
        %v359 = vld [vmem:[%s3 + $0x70] sm:$0xff]
        %v360 = vld [vmem:[%s3 + $0x78] sm:$0xff]
        %v361 = vld [vmem:[%s4] sm:$0x1]
        %v363 = vlaneseq
        %v364 = vshrl.u32 %v363, 7
        %v365 = vsub.s32 0, %v364
        %v366 = vrot.slane %v361, %v365
        %368 = vmatprep.subr.mxu0 0.0
        %369 = vmatpush1.msra.mxu0 %v345
        %370 = vmatprep.subr.mxu0 0.0
        %371 = vmatpush1.msra.mxu0 %v346
        %372 = vmatprep.subr.mxu0 0.0
        %373 = vmatpush1.msra.mxu0 %v347
        %374 = vmatprep.subr.mxu0 0.0
        %375 = vmatpush1.msra.mxu0 %v348
        %376 = vmatprep.subr.mxu0 0.0
        %377 = vmatpush1.msra.mxu0 %v349
        %378 = vmatprep.subr.mxu0 0.0
        %379 = vmatpush1.msra.mxu0 %v350
        %380 = vmatprep.subr.mxu0 0.0
        %381 = vmatpush1.msra.mxu0 %v351
        %382 = vmatprep.subr.mxu0 0.0
        %383 = vmatpush1.msra.mxu0 %v352
        %384 = vmatprep.subr.mxu0 0.0
        %385 = vmatpush1.msra.mxu0 %v353
        %386 = vmatprep.subr.mxu0 0.0
        %387 = vmatpush1.msra.mxu0 %v354
        %388 = vmatprep.subr.mxu0 0.0
        %389 = vmatpush1.msra.mxu0 %v355
        %390 = vmatprep.subr.mxu0 0.0
        %391 = vmatpush1.msra.mxu0 %v356
        %392 = vmatprep.subr.mxu0 0.0
        %393 = vmatpush1.msra.mxu0 %v357
        %394 = vmatprep.subr.mxu0 0.0
        %395 = vmatpush1.msra.mxu0 %v358
        %396 = vmatprep.subr.mxu0 0.0
        %397 = vmatpush1.msra.mxu0 %v359
        %398 = vmatprep.subr.mxu0 0.0
        %399 = vmatpush1.msra.mxu0 %v360
        %400 = vmatprep.subr.mxu0 0.0
        %401 = vmatpush1.msra.mxu0 0.0
        %402 = vmatprep.subr.mxu0 0.0
        %403 = vmatpush1.msra.mxu0 0.0
        %404 = vmatprep.subr.mxu0 0.0
        %405 = vmatpush1.msra.mxu0 0.0
        %406 = vmatprep.subr.mxu0 0.0
        %407 = vmatpush1.msra.mxu0 0.0
        %408 = vmatprep.subr.mxu0 0.0
        %409 = vmatpush1.msra.mxu0 0.0
        %410 = vmatprep.subr.mxu0 0.0
        %411 = vmatpush1.msra.mxu0 0.0
        %412 = vmatprep.subr.mxu0 0.0
        %413 = vmatpush1.msra.mxu0 0.0
        %414 = vmatprep.subr.mxu0 0.0
        %415 = vmatpush1.msra.mxu0 0.0
        %416 = vmatprep.subr.mxu0 0.0
        %417 = vmatpush1.msra.mxu0 0.0
        %418 = vmatprep.subr.mxu0 0.0
        %419 = vmatpush1.msra.mxu0 0.0
        %420 = vmatprep.subr.mxu0 0.0
        %421 = vmatpush1.msra.mxu0 0.0
        %422 = vmatprep.subr.mxu0 0.0
        %423 = vmatpush1.msra.mxu0 0.0
        %424 = vmatprep.subr.mxu0 0.0
        %425 = vmatpush1.msra.mxu0 0.0
        %426 = vmatprep.subr.mxu0 0.0
        %427 = vmatpush1.msra.mxu0 0.0
        %428 = vmatprep.subr.mxu0 0.0
        %429 = vmatpush1.msra.mxu0 0.0
        %430 = vmatprep.subr.mxu0 0.0
        %431 = vmatpush1.msra.mxu0 0.0
        %432 = vmatprep.mubr.f32.mxu0 0.0
        %433 = vmatmul.mubr.f32.gmra.mrb[0].mxu0 %v344
        %v434 = vpop.f32.mrb[0].mxu0
        %v435 = vadd.f32 %v366, %v434
        %v436 = vpop.f32.mrb[0].mxu0
        %437 = vdwg.mxu0
        %vm438 = vcmask 15360
        %439 = vst.msk [vmem:[%s257] sm:$0xff] %vm438, %v435
        %441 = vrot.lane.b32.xlu0 %v435, 1
        %v442 = vpop.permute.xlu0 %441
        %v444 = vsub.f32 %v435, %v442
        %v445 = vxor.u32 %v444, 2147483648
        %v446 = vmul.f32 %v445, 1.442695
        %v447 = vpow.pop %v446
        %v448 = vadd.f32 %v447, 1.0
        %v449 = vrcp.pop %v448
        %v450 = vmul.f32 1.0, %v449
        %452 = vset.pattern.permute.xlu0 1
        %453 = vperm.xlu0 %452, %v450
        %v454 = vpop.permute.xlu0 %453
        %v456 = vmul.f32 %v454, %v258
        %457 = vst.msk [vmem:[%s249] sm:$0xff] %vm270, %v456
        %p458 = scmp.lt.s32.totalorder %s21, 1
        %s459 = scalar_select %p458, %s21, 1
        %s460 = smul.addr %s459, 8
        %s461 = scalar_lea.vmem %s5, %s460
        %s462 = sand.u32 %s165, 1
        %s463 = scalar_lea.sflag [#allocation3], %s462
        %s464 = sand.u32 %s165, 1
        %s465 = smul.addr %s464, 8
        %s466 = scalar_lea.vmem [#allocation2], %s465
        // Predicated region
        $region41: #{tpu_custom_call.1} parent=39 // pred_check
          %p467 = pneg %p149
        $region42: #{tpu_custom_call.1} parent=39 // pred_check_branch
          %469 = sbr.rel (%p467) target = $region44
        $region43: #{tpu_custom_call.1} parent=39 // pred_region
          _
        $region44: #{tpu_custom_call.1} parent=39 // pred_fallthru
          _
        // Predicated region
        $region45: #{tpu_custom_call.1} parent=39 // pred_check
          %p470 = pneg %p175
        $region46: #{tpu_custom_call.1} parent=39 // pred_check_branch
          %472 = sbr.rel (%p470) target = $region48
        $region47: #{tpu_custom_call.1} parent=39 // pred_region
          %s474 = ssub.s32 128, 128
          %475 = vsyncadd %s463, %s474
          %s476 = smul.addr %s21, 128
          %s477 = scalar_lea.hbm %s6, %s476
          %s479 = sshll.u32 %s466, 4
          %s480 = int_to_ptr.vmem [resolvable:$true] %s479
          %482 = dma.vmem_to_hbm [thread:$0]  %s480, 128, %s477, %s463
        $region48: #{tpu_custom_call.1} parent=39 // pred_fallthru
          _
      $region40: #{tpu_custom_call.1} parent=5 // pred_fallthru
        _
      %p483 = scmp.le.s32.totalorder 2, %s16
      // Predicated region
      $region49: #{tpu_custom_call.1} parent=5 // pred_check
        %p484 = pneg %p483
      $region50: #{tpu_custom_call.1} parent=5 // pred_check_branch
        %486 = sbr.rel (%p484) target = $region52
      $region51: #{tpu_custom_call.1} parent=5 // pred_region
        %s487 = ssub.s32 %s16, 2
        // Predicated region
        $region53: #{tpu_custom_call.1} parent=51 // pred_check
          %p488 = pneg %p155
        $region54: #{tpu_custom_call.1} parent=51 // pred_check_branch
          %490 = sbr.rel (%p488) target = $region56
        $region55: #{tpu_custom_call.1} parent=51 // pred_region
          %p491 = scmp.lt.s32.totalorder %s22, 1
          %s492 = scalar_select %p491, %s22, 1
          %s493 = smul.addr %s492, 8
          %s494 = scalar_lea.vmem %s5, %s493
        $region56: #{tpu_custom_call.1} parent=51 // pred_fallthru
          _
        // Predicated region
        $region57: #{tpu_custom_call.1} parent=51 // pred_check
          %p495 = pneg %p181
        $region58: #{tpu_custom_call.1} parent=51 // pred_check_branch
          %497 = sbr.rel (%p495) target = $region60
        $region59: #{tpu_custom_call.1} parent=51 // pred_region
          %s498 = sand.u32 %s166, 1
          %s499 = scalar_lea.sflag [#allocation3], %s498
          %s500 = sand.u32 %s166, 1
          %s501 = smul.addr %s500, 8
          %s502 = scalar_lea.vmem [#allocation2], %s501
          %503 = dma.done %s499, 128
        $region60: #{tpu_custom_call.1} parent=51 // pred_fallthru
          _
      $region52: #{tpu_custom_call.1} parent=5 // pred_fallthru
        _
    $region6: #{tpu_custom_call.1} parent=1 // loop_footer
      %s20 = sadd.s32 1, %s16
    $region7: #{tpu_custom_call.1} parent=1 // loop_footer_branch
      %15 = sbr.rel target = $region3
    $region8: #{tpu_custom_call.1} parent=1 // loop_exit
      _
    %504 = vsyncpa [#allocation3], 1
    %s505 = scalar_lea.sflag [#allocation3], 1
    %506 = vsyncpa %s505, 1

</llo_original>
